<compile_context>
chip_gen: v6e
topology: v6e:2x2x1
jax: 0.10.0
libtpu: 0.0.40
codegen_flags: <defaults>
</compile_context>

<pallas_src>
import jax
import jax.numpy as jnp
from jax.experimental import pallas as pl
from jax.experimental.pallas import tpu as pltpu


def _round_up(n, m):
    return ((n + m - 1) // m) * m


def _cdiv(a, b):
    return -(-a // b)


def _prefer_bf16_exp():
    """bf16 VPU/EUP exist on v6e/v7x but not v5e (best-effort device check)."""
    try:
        kind = jax.devices()[0].device_kind.lower()
    except Exception:
        return True
    return not ("v5 lite" in kind or "v5lite" in kind or "v5e" in kind)


def _make_nce_kernel(K, TK, mask_k, exp_in_bf16):
    """Builds the per-(TB, TK)-tile kernel.

    Scratch layout (single merged (TB, 8) f32 buffer):
      col 0: x0  (positive-class logit, captured on the first K tile)
      col 1: m   (running max for the online logsumexp)
      col 2: s   (running rescaled sum)
    """

    def kernel(x_ref, o_ref, scr_ref):
        k = pl.program_id(1)
        nk = pl.num_programs(1)
        tb = scr_ref.shape[0]

        @pl.when(k == 0)
        def _init():
            scr_ref[:, 0:1] = x_ref[:, 0:1].astype(jnp.float32)         # x0
            scr_ref[:, 1:2] = jnp.full((tb, 1), -jnp.inf, jnp.float32)  # m
            scr_ref[:, 2:3] = jnp.zeros((tb, 1), jnp.float32)           # s

        xv = x_ref[...]                                     # (TB, TK), native dtype
        if mask_k:
            # Mask the out-of-range class columns of the ragged last K tile.
            col = k * TK + jax.lax.broadcasted_iota(jnp.int32, xv.shape, 1)
            xv = jnp.where(col < K, xv, jnp.asarray(-jnp.inf, dtype=xv.dtype))

        m_old = scr_ref[:, 1:2]                             # (TB, 1) f32
        s_old = scr_ref[:, 2:3]                             # (TB, 1) f32
        # max is exact in any dtype; only the (TB,1) result is upcast.
        m_new = jnp.maximum(m_old, jnp.max(xv, axis=-1, keepdims=True).astype(jnp.float32))

        if exp_in_bf16:
            # bf16 subtract + exp (v6e/v7x EUP is bf16-native); f32 accumulation.
            p = jnp.exp(xv - m_new.astype(xv.dtype))
            tile_sum = jnp.sum(p, axis=-1, keepdims=True, dtype=jnp.float32)
        else:
            p = jnp.exp(xv.astype(jnp.float32) - m_new)
            tile_sum = jnp.sum(p, axis=-1, keepdims=True)

        # TODO(synk): a row whose logits are all -inf yields NaN here (from
        # exp(-inf - -inf)); PyTorch CrossEntropyLoss also returns NaN for that
        # degenerate input, so we do not special-case it.
        scr_ref[:, 2:3] = s_old * jnp.exp(m_old - m_new) + tile_sum
        scr_ref[:, 1:2] = m_new

        @pl.when(k == nk - 1)
        def _finalize():
            lse = jnp.log(scr_ref[:, 2:3]) + scr_ref[:, 1:2]   # (TB, 1)
            o_ref[...] = lse - scr_ref[:, 0:1]                 # per-row loss

    return kernel


def nce_softmax_loss(x, *, reduction="mean", max_block_rows=1024,
                     max_block_cols=2048, vmem_buffer_bytes=4 * 1024 * 1024,
                     bf16_exp=None):
    """InfoNCE / softmax CE loss with all-zero labels (PyTorch NCESoftmaxLoss)."""
    B, K = x.shape
    itemsize = jnp.dtype(x.dtype).itemsize
    sub = 8 * max(1, 4 // itemsize)           # sublane packing: 8 (f32) / 16 (bf16)

    # --- class-axis tiling ----------------------------------------------------
    max_block_cols = max(128, (max_block_cols // 128) * 128)   # keep 128-aligned
    TK = K if K <= max_block_cols else max_block_cols
    nk = _cdiv(K, TK)
    mask_k = (K % TK) != 0                    # ragged K tail -> in-kernel mask

    # --- batch-axis tiling ----------------------------------------------------
    # Target >= 2 (preferably 4) batch blocks so the pipeline overlaps DMA with
    # compute and v7x can shard the "parallel" axis across both TensorCores,
    # while staying under the per-buffer VMEM budget.
    max_block_rows = max(sub, (max_block_rows // sub) * sub)
    ideal_nb = 4 if B >= 4 * sub else (2 if B >= 2 * sub else 1)
    TB_budget = max(sub, (vmem_buffer_bytes // (TK * itemsize)) // sub * sub)
    TB_split = _round_up(_cdiv(B, ideal_nb), sub)
    TB = max(sub, min(max_block_rows, TB_budget, TB_split))
    nb = _cdiv(B, TB)                         # ragged last batch block is fine

    # --- dtype of the exp chain -----------------------------------------------
    if bf16_exp is None:
        bf16_exp = _prefer_bf16_exp()
    exp_in_bf16 = bool(bf16_exp) and (x.dtype == jnp.bfloat16)

    # --- VMEM limit from actual usage (v7x has only 64 MiB per TC) -------------
    vmem_need = (2 * TB * TK * itemsize                     # double-buffered input
                 + 3 * TB * TK * 4                          # f32 elementwise temps (upper bound)
                 + TB * 128 * 4                             # merged scratch (lane-padded)
                 + 2 * TB * 128 * 4                         # double-buffered output (lane-padded)
                 + (2 << 20))                               # headroom
    vmem_limit = int(min(max(vmem_need, 16 << 20), 64 << 20))

    kernel = _make_nce_kernel(K, TK, mask_k, exp_in_bf16)

    per_row = pl.pallas_call(
        kernel,
        out_shape=jax.ShapeDtypeStruct((B, 1), jnp.float32),
        grid_spec=pltpu.PrefetchScalarGridSpec(
            num_scalar_prefetch=0,
            grid=(nb, nk),                                   # reduction axis last
            # If profiling shows exposed DMA at batch-tile boundaries, add
            # pipeline_mode=pl.Buffered(3) here (check v7x's 64 MiB first).
            in_specs=[pl.BlockSpec((TB, TK), lambda i, k: (i, k))],
            out_specs=pl.BlockSpec((TB, 1), lambda i, k: (i, 0)),
            scratch_shapes=[pltpu.VMEM((TB, 8), jnp.float32)],   # x0 | m | s
        ),
        compiler_params=pltpu.CompilerParams(
            dimension_semantics=("parallel", "arbitrary"),
            vmem_limit_bytes=vmem_limit,
        ),
        cost_estimate=pl.CostEstimate(
            flops=4 * B * K,
            transcendentals=B * K + B,
            bytes_accessed=B * K * itemsize + B * 4,
        ),
    )(x)

    losses = per_row[:B, 0]
    if reduction == "none":
        return losses
    if reduction == "sum":
        return jnp.sum(losses)
    return jnp.sum(losses) / B                # 'mean' (module default)


if __name__ == "__main__":
    # Primary small-shape check: batch of 8, 128 classes (1 pos + 127 neg).
    B, K = 8, 128
    x = jax.random.normal(jax.random.PRNGKey(0), (B, K), dtype=jnp.float32)
    loss = jax.block_until_ready(nce_softmax_loss(x))
    ref = jnp.mean(jax.nn.logsumexp(x, axis=-1) - x[:, 0])
    assert jnp.allclose(loss, ref, rtol=1e-5, atol=1e-5), (loss, ref)

    # Ragged batch (13 rows -> one partial batch block, no HBM padding) plus
    # the online-logsumexp K tiling (384 = 3 tiles of 128).
    x2 = jax.random.normal(jax.random.PRNGKey(1), (13, 384), dtype=jnp.float32)
    loss2 = jax.block_until_ready(nce_softmax_loss(x2, max_block_cols=128))
    ref2 = jnp.mean(jax.nn.logsumexp(x2, axis=-1) - x2[:, 0])
    assert jnp.allclose(loss2, ref2, rtol=1e-5, atol=1e-4), (loss2, ref2)

    # Ragged class axis (K=200, TK=128 -> in-kernel -inf iota mask) plus a
    # multi-block "parallel" batch grid (32 rows -> 4 blocks of 8).
    x3 = jax.random.normal(jax.random.PRNGKey(2), (32, 200), dtype=jnp.float32)
    loss3 = jax.block_until_ready(nce_softmax_loss(x3, max_block_cols=128))
    ref3 = jnp.mean(jax.nn.logsumexp(x3, axis=-1) - x3[:, 0])
    assert jnp.allclose(loss3, ref3, rtol=1e-5, atol=1e-4), (loss3, ref3)

    print("KERNEL_OK")
</pallas_src>

<mosaic_0001>
module attributes {stable_mosaic.version = 11 : i64} {
  func.func @kernel(%arg0: i32, %arg1: i32, %arg2: memref<8x128xf32, #tpu.memory_space<vmem>>, %arg3: memref<8x1xf32, #tpu.memory_space<vmem>>, %arg4: memref<8x8xf32, #tpu.memory_space<vmem>>) attributes {dimension_semantics = [#tpu.dimension_semantics<parallel>, #tpu.dimension_semantics<arbitrary>], iteration_bounds = array<i64: 1, 1>, scalar_prefetch = 0 : i64, scratch_operands = 1 : i64, tpu.core_type = #tpu.core_type<tc>, window_params = [{transform_indices = @transform_0, window_bounds = array<i64: 8, 128>}, {transform_indices = @transform_1, window_bounds = array<i64: 8, 1>}]} {
    %c0_i32 = arith.constant 0 : i32
    %0 = arith.cmpi eq, %arg1, %c0_i32 : i32
    %1 = arith.extui %0 : i1 to i32
    %c0_i32_0 = arith.constant 0 : i32
    %2 = arith.cmpi ne, %1, %c0_i32_0 : i32
    scf.if %2 {
      %c0_11 = arith.constant 0 : index
      %c0_12 = arith.constant 0 : index
      %23 = vector.load %arg2[%c0_11, %c0_12] : memref<8x128xf32, #tpu.memory_space<vmem>>, vector<8x1xf32>
      %c0_13 = arith.constant 0 : index
      %c0_14 = arith.constant 0 : index
      %24 = vector.load %arg4[%c0_13, %c0_14] : memref<8x8xf32, #tpu.memory_space<vmem>>, vector<8x1xf32>
      tpu.vector_store %arg4[%c0_13, %c0_14], %23 {strides = array<i32>} : memref<8x8xf32, #tpu.memory_space<vmem>>, vector<8x1xf32>,
      %cst_15 = arith.constant 0xFF800000 : f32
      %25 = vector.broadcast %cst_15 : f32 to vector<8x1xf32>
      %c0_16 = arith.constant 0 : index
      %c1_17 = arith.constant 1 : index
      %26 = vector.load %arg4[%c0_16, %c1_17] : memref<8x8xf32, #tpu.memory_space<vmem>>, vector<8x1xf32>
      tpu.vector_store %arg4[%c0_16, %c1_17], %25 {strides = array<i32>} : memref<8x8xf32, #tpu.memory_space<vmem>>, vector<8x1xf32>,
      %cst_18 = arith.constant 0.000000e+00 : f32
      %27 = vector.broadcast %cst_18 : f32 to vector<8x1xf32>
      %c0_19 = arith.constant 0 : index
      %c2_20 = arith.constant 2 : index
      %28 = vector.load %arg4[%c0_19, %c2_20] : memref<8x8xf32, #tpu.memory_space<vmem>>, vector<8x1xf32>
      tpu.vector_store %arg4[%c0_19, %c2_20], %27 {strides = array<i32>} : memref<8x8xf32, #tpu.memory_space<vmem>>, vector<8x1xf32>,
    } else {
    }
    %c0 = arith.constant 0 : index
    %c0_1 = arith.constant 0 : index
    %3 = vector.load %arg2[%c0, %c0_1] : memref<8x128xf32, #tpu.memory_space<vmem>>, vector<8x128xf32>
    %c0_2 = arith.constant 0 : index
    %c1 = arith.constant 1 : index
    %4 = vector.load %arg4[%c0_2, %c1] : memref<8x8xf32, #tpu.memory_space<vmem>>, vector<8x1xf32>
    %c0_3 = arith.constant 0 : index
    %c2 = arith.constant 2 : index
    %5 = vector.load %arg4[%c0_3, %c2] : memref<8x8xf32, #tpu.memory_space<vmem>>, vector<8x1xf32>
    %cst = arith.constant dense<0xFF800000> : vector<8xf32>
    %6 = vector.multi_reduction <maximumf>, %3, %cst [1] : vector<8x128xf32> to vector<8xf32>
    %7 = vector.shape_cast %6 : vector<8xf32> to vector<8x1xf32>
    %8 = arith.maximumf %4, %7 : vector<8x1xf32>
    %9 = vector.broadcast %8 : vector<8x1xf32> to vector<8x128xf32>
    %10 = arith.subf %3, %9 : vector<8x128xf32>
    %11 = math.exp %10 : vector<8x128xf32>
    %cst_4 = arith.constant dense<0.000000e+00> : vector<8xf32>
    %12 = vector.multi_reduction <add>, %11, %cst_4 [1] : vector<8x128xf32> to vector<8xf32>
    %13 = vector.shape_cast %12 : vector<8xf32> to vector<8x1xf32>
    %14 = arith.subf %4, %8 : vector<8x1xf32>
    %15 = math.exp %14 : vector<8x1xf32>
    %16 = arith.mulf %5, %15 : vector<8x1xf32>
    %17 = arith.addf %16, %13 : vector<8x1xf32>
    %c0_5 = arith.constant 0 : index
    %c2_6 = arith.constant 2 : index
    %18 = vector.load %arg4[%c0_5, %c2_6] : memref<8x8xf32, #tpu.memory_space<vmem>>, vector<8x1xf32>
    tpu.vector_store %arg4[%c0_5, %c2_6], %17 {strides = array<i32>} : memref<8x8xf32, #tpu.memory_space<vmem>>, vector<8x1xf32>,
    %c0_7 = arith.constant 0 : index
    %c1_8 = arith.constant 1 : index
    %19 = vector.load %arg4[%c0_7, %c1_8] : memref<8x8xf32, #tpu.memory_space<vmem>>, vector<8x1xf32>
    tpu.vector_store %arg4[%c0_7, %c1_8], %8 {strides = array<i32>} : memref<8x8xf32, #tpu.memory_space<vmem>>, vector<8x1xf32>,
    %c0_i32_9 = arith.constant 0 : i32
    %20 = arith.cmpi eq, %arg1, %c0_i32_9 : i32
    %21 = arith.extui %20 : i1 to i32
    %c0_i32_10 = arith.constant 0 : i32
    %22 = arith.cmpi ne, %21, %c0_i32_10 : i32
    scf.if %22 {
      %c0_11 = arith.constant 0 : index
      %c2_12 = arith.constant 2 : index
      %23 = vector.load %arg4[%c0_11, %c2_12] : memref<8x8xf32, #tpu.memory_space<vmem>>, vector<8x1xf32>
      %24 = math.log %23 : vector<8x1xf32>
      %c0_13 = arith.constant 0 : index
      %c1_14 = arith.constant 1 : index
      %25 = vector.load %arg4[%c0_13, %c1_14] : memref<8x8xf32, #tpu.memory_space<vmem>>, vector<8x1xf32>
      %26 = arith.addf %24, %25 : vector<8x1xf32>
      %c0_15 = arith.constant 0 : index
      %c0_16 = arith.constant 0 : index
      %27 = vector.load %arg4[%c0_15, %c0_16] : memref<8x8xf32, #tpu.memory_space<vmem>>, vector<8x1xf32>
      %28 = arith.subf %26, %27 : vector<8x1xf32>
      %c0_17 = arith.constant 0 : index
      %c0_18 = arith.constant 0 : index
      %29 = vector.load %arg3[%c0_17, %c0_18] : memref<8x1xf32, #tpu.memory_space<vmem>>, vector<8x1xf32>
      tpu.vector_store %arg3[%c0_17, %c0_18], %28 {strides = array<i32>} : memref<8x1xf32, #tpu.memory_space<vmem>>, vector<8x1xf32>,
    } else {
    }
    return
  }
  func.func @transform_0(%arg0: i32, %arg1: i32) -> (i32, i32) {
    %c0_i32 = arith.constant 0 : i32
    return %arg0, %arg1 : i32, i32
  }
  func.func @transform_1(%arg0: i32, %arg1: i32) -> (i32, i32) {
    %c0_i32 = arith.constant 0 : i32
    %c0_i32_0 = arith.constant 0 : i32
    return %arg0, %c0_i32 : i32, i32
  }
}

</mosaic_0001>

<llo_original>
// kernel: tpu_custom_call.1
$region0: #{tpu_custom_call.1}
  #allocation0 [shape = 'u32[]', space=smem, size = 0x4, offset = 0x4, fixed_abs, tag = 'smem constant byte address 0x4 - core index']
  #allocation1 [shape = 'u32[144,128]{1,0:T(1,128)}', space=vmem, size = 0x12000, scoped, tag = 'internal scratch']
  #allocation2 [shape = 'f32[8,8]{1,0:T(8,128)}', space=vmem, size = 0x1000, scoped, tag = 'scratch operand']
  %s0 = inlined_call_operand.hbm [shape: f32[8,128], index: 0, kind: input, shape index: {}]
  %s1 = inlined_call_operand.vmem [shape: f32[8,1], index: 1, kind: output, shape index: {}]
  %s2 = sld [smem:[#allocation0]]
  $region26: #{tpu_custom_call.1} parent=0
    _
  %s4 = ssub.s32 1, %s2
  %s5 = scalar_select 0, %s4, %s2
  $region1: #{tpu_custom_call.1} parent=0
    #allocation3 [shape = 'u8[4096]{0}', space=vmem, size = 0x1000, scoped, tag = 'input window, operand 0, single buffered']
    #allocation4 [shape = 's32[1]{0}', space=sflag, size = 0x4, scoped, tag = 'scoped memory for tpu_custom_call.1']
    %6 = vsyncpa [#allocation4], 0
    // Predicated region
    $region2: #{tpu_custom_call.1} parent=1 // pred_check
      _
    $region3: #{tpu_custom_call.1} parent=1 // pred_check_branch
      %8 = sbr.rel (0) target = $region5
    $region4: #{tpu_custom_call.1} parent=1 // pred_region
      %s10 = ssub.s32 128, 128
      %11 = vsyncadd [#allocation4], %s10
      %s13 = sshll.u32 [#allocation3], 4
      %s14 = int_to_ptr.vmem [resolvable:$true] %s13
      %16 = dma.hbm_to_vmem [thread:$0]  %s0, 128, %s14, [#allocation4]
    $region5: #{tpu_custom_call.1} parent=1 // pred_fallthru
      _
    // Predicated region
    $region6: #{tpu_custom_call.1} parent=1 // pred_check
      _
    $region7: #{tpu_custom_call.1} parent=1 // pred_check_branch
      %18 = sbr.rel (0) target = $region9
    $region8: #{tpu_custom_call.1} parent=1 // pred_region
      %19 = dma.done [#allocation4], 128
    $region9: #{tpu_custom_call.1} parent=1 // pred_fallthru
      _
    %p20 = scmp.eq.s32.totalorder 0, 0
    // Predicated region
    $region10: #{tpu_custom_call.1} parent=1 // pred_check
      %p21 = pneg %p20
    $region11: #{tpu_custom_call.1} parent=1 // pred_check_branch
      %23 = sbr.rel (%p21) target = $region13
    $region12: #{tpu_custom_call.1} parent=1 // pred_region
      %v24 = vld [vmem:[#allocation3] sm:$0xff]
      %vm25 = vcmask 7168
      %26 = vst.msk [vmem:[#allocation2] sm:$0xff] %vm25, %v24
      %vm27 = vcmask 15368
      %28 = vst.msk [vmem:[#allocation2] sm:$0xff] %vm27, -inf
      %vm29 = vcmask 23568
      %30 = vst.msk [vmem:[#allocation2] sm:$0xff] %vm29, 0.0
    $region13: #{tpu_custom_call.1} parent=1 // pred_fallthru
      _
    %v31 = vld [vmem:[#allocation3] sm:$0xff]
    %v32 = vld [vmem:[#allocation2] sm:$0xff]
    %33 = vmax.xlane.f32.xlu0 %v31
    %v34 = vpop.xlane.xlu0 %33
    %v35 = vmax.f32 %v32, %v34
    %37 = vset.pattern.permute.xlu0 1
    %38 = vperm.xlu0 %37, %v35
    %v39 = vpop.permute.xlu0 %38
    %v41 = vsub.f32 %v31, %v39
    %v42 = vmul.f32 %v41, 1.442695
    %v43 = vpow.pop %v42
    %44 = vadd.xlane.f32.xlu0 %v43
    %v45 = vpop.xlane.xlu0 %44
    %v46 = vsub.f32 %v32, %v35
    %v47 = vmul.f32 %v46, 1.442695
    %v48 = vpow.pop %v47
    %50 = vrot.lane.b32.xlu0 %v48, 1
    %v51 = vpop.permute.xlu0 %50
    %v53 = vmul.f32 %v32, %v51
    %v54 = vadd.f32 %v53, %v45
    %vm55 = vcmask 23568
    %56 = vst.msk [vmem:[#allocation2] sm:$0xff] %vm55, %v54
    %vm57 = vcmask 15368
    %58 = vst.msk [vmem:[#allocation2] sm:$0xff] %vm57, %v35
    // Predicated region
    $region14: #{tpu_custom_call.1} parent=1 // pred_check
      %p59 = pneg %p20
    $region15: #{tpu_custom_call.1} parent=1 // pred_check_branch
      %61 = sbr.rel (%p59) target = $region17
    $region16: #{tpu_custom_call.1} parent=1 // pred_region
      %v62 = vld [vmem:[#allocation2] sm:$0xff]
      %v63 = vlog2.pop %v62
      %v64 = vmul.f32 %v63, 0.6931472
      %66 = vrot.lane.b32.xlu0 %v62, 1
      %v67 = vpop.permute.xlu0 %66
      %v69 = vadd.f32 %v64, %v67
      %70 = vrot.lane.b32.xlu0 %v62, 2
      %v71 = vpop.permute.xlu0 %70
      %v73 = vsub.f32 %v69, %v71
      %75 = vrot.lane.b32.xlu0 %v73, 126
      %v76 = vpop.permute.xlu0 %75
      %vm78 = vcmask 7168
      %79 = vst.msk [vmem:[%s1] sm:$0xff] %vm78, %v76
    $region17: #{tpu_custom_call.1} parent=1 // pred_fallthru
      _
    // Predicated region
    $region18: #{tpu_custom_call.1} parent=1 // pred_check
      _
    $region19: #{tpu_custom_call.1} parent=1 // pred_check_branch
      %81 = sbr.rel (0) target = $region21
    $region20: #{tpu_custom_call.1} parent=1 // pred_region
      _
    $region21: #{tpu_custom_call.1} parent=1 // pred_fallthru
      _
    // Predicated region
    $region22: #{tpu_custom_call.1} parent=1 // pred_check
      _
    $region23: #{tpu_custom_call.1} parent=1 // pred_check_branch
      %83 = sbr.rel (0) target = $region25
    $region24: #{tpu_custom_call.1} parent=1 // pred_region
      _
    $region25: #{tpu_custom_call.1} parent=1 // pred_fallthru
      _
    %84 = vsyncpa [#allocation4], 1

</llo_original>
